<compile_context>
chip_gen: v5e
topology: v5e:2x2
jax: 0.10.0
libtpu: 0.0.40
codegen_flags: <defaults>
</compile_context>

<pallas_src>
import jax
import jax.numpy as jnp
from jax.experimental import pallas as pl
from jax.experimental.pallas import tpu as pltpu

EPS = 1e-5
NEG_SLOPE = 0.2
LANE = 128


def _d1d_kernel(x_ref, w_ref, p_ref, o_ref):
    # x: (N, tk)  w: (tk, TILE_F)  p: (2, TILE_F) = [gamma; beta]  o: (N, TILE_F) f32
    k = pl.program_id(1)

    partial = jnp.dot(x_ref[...], w_ref[...], preferred_element_type=jnp.float32)

    @pl.when(k == 0)
    def _():
        o_ref[...] = partial

    @pl.when(k > 0)
    def _():
        o_ref[...] += partial

    @pl.when(k == pl.num_programs(1) - 1)
    def _():
        y = o_ref[...]
        inv_n = 1.0 / y.shape[0]
        # Batch stats over axis 0 (full batch is resident; N is never tiled).
        mean = jnp.sum(y, axis=0, keepdims=True) * inv_n
        # E[y^2] - mean^2: avoids materializing (y - mean); clamp tiny negatives.
        var = jnp.maximum(
            jnp.sum(y * y, axis=0, keepdims=True) * inv_n - mean * mean, 0.0)
        inv_std = jax.lax.rsqrt(var + EPS)          # EUP slot (cheap)
        p = p_ref[...]
        scale = p[0:1, :] * inv_std                 # gamma / std
        shift = p[1:2, :] - mean * scale            # beta - mean * scale
        out = y * scale + shift
        # LeakyReLU(0.2) as a single vmax (valid because 0 < slope < 1).
        o_ref[...] = jnp.maximum(out, NEG_SLOPE * out)


def _vmem_capacity_bytes():
    try:
        return int(pltpu.get_tpu_info().vmem_capacity_bytes)
    except Exception:
        return 64 << 20   # conservative fallback (v7x per-TC VMEM)


def _pick_tk(d_in):
    # K tile for streaming x: full Din when small, else an MXU-friendly divisor.
    if d_in <= 1024:
        return d_in
    for cand in (512, 256, 128):
        if d_in % cand == 0:
            return cand
    return d_in


def _footprint_bytes(n, tk, tile_f, mm_bytes):
    return (2 * n * tk * mm_bytes          # x slabs (double-buffered over K)
            + 2 * tk * tile_f * mm_bytes   # weight tiles
            + 2 * 2 * tile_f * 4           # [gamma; beta] tiles
            + 2 * n * tile_f * 4)          # f32 output / accumulator tiles


def _pick_tile_f(f_pad, n, tk, mm_bytes, budget, desired):
    cap = min(desired, f_pad)
    if f_pad >= 2 * LANE:
        cap = min(cap, f_pad // 2)   # >=2 F steps: v7x megacore + pipelining
    cap = max(LANE, (cap // LANE) * LANE)
    t = cap
    while t >= LANE:
        if f_pad % t == 0 and _footprint_bytes(n, tk, t, mm_bytes) <= budget:
            return t
        t -= LANE
    return LANE   # 128 always divides f_pad; smallest lane-aligned fallback


def d1d_forward(x, weight, bias, gamma, beta, *,
                tile_f=None, matmul_dtype=jnp.bfloat16):
    """Fused Linear -> BatchNorm1d (training-mode stats) -> LeakyReLU(0.2).

    x: (N, Din) f32; weight: (F, Din) (PyTorch layout); bias/gamma/beta: (F,).
    `bias` is accepted for API parity but is mathematically cancelled by the
    BN mean subtraction, so it never enters the kernel.
    """
    # TODO(synk): BatchNorm running_mean / running_var buffers are not updated
    # (normalization-only forward); callers relying on eval-mode stats must
    # track them separately.
    del bias
    n, d_in = x.shape
    f = weight.shape[0]
    mm_bytes = jnp.dtype(matmul_dtype).itemsize

    f_pad = ((f + LANE - 1) // LANE) * LANE
    tk = _pick_tk(d_in)

    vmem_cap = _vmem_capacity_bytes()
    budget = min(100 << 20, int(vmem_cap * 0.7))
    desired = tile_f if tile_f is not None else (1024 if budget >= (64 << 20) else 512)
    tile_f = _pick_tile_f(f_pad, n, tk, mm_bytes, budget, desired)

    footprint = _footprint_bytes(n, tk, tile_f, mm_bytes)
    vmem_limit = int(min(max(16 << 20, footprint + (8 << 20)), vmem_cap))

    # Weight in MXU-native (Din, F_pad) layout; zero-pad only when F is not
    # lane-aligned (zero columns -> y == 0, scale == shift == 0 -> output 0).
    w_t = weight.T.astype(matmul_dtype)
    if f != f_pad:
        w_t = jnp.zeros((d_in, f_pad), matmul_dtype).at[:, :f].set(w_t)
    params = jnp.zeros((2, f_pad), jnp.float32)
    params = params.at[0, :f].set(gamma).at[1, :f].set(beta)
    x_mm = x.astype(matmul_dtype)

    grid = (f_pad // tile_f, d_in // tk)

    cost = pl.CostEstimate(
        flops=2 * n * d_in * f_pad + 8 * n * f_pad,
        transcendentals=f_pad,
        bytes_accessed=(n * d_in + d_in * f_pad) * mm_bytes
                       + (2 * f_pad + n * f_pad) * 4,
    )

    out_p = pl.pallas_call(
        _d1d_kernel,
        out_shape=jax.ShapeDtypeStruct((n, f_pad), jnp.float32),
        grid=grid,
        in_specs=[
            pl.BlockSpec((n, tk), lambda j, k: (0, k)),        # x (N, tk) slab
            pl.BlockSpec((tk, tile_f), lambda j, k: (k, j)),   # weight tile
            pl.BlockSpec((2, tile_f), lambda j, k: (0, j)),    # [gamma; beta]
        ],
        out_specs=pl.BlockSpec((n, tile_f), lambda j, k: (0, j)),
        compiler_params=pltpu.CompilerParams(
            dimension_semantics=("parallel", "arbitrary"),
            vmem_limit_bytes=vmem_limit,
        ),
        cost_estimate=cost,
    )(x_mm, w_t, params)

    return out_p[:, :f] if f != f_pad else out_p


def _reference(x, weight, bias, gamma, beta):
    y = x @ weight.T + bias
    mean = y.mean(axis=0, keepdims=True)
    var = y.var(axis=0, keepdims=True)          # biased, matches PyTorch BN norm
    y_hat = (y - mean) / jnp.sqrt(var + EPS)
    out = gamma * y_hat + beta
    return jnp.where(out >= 0, out, NEG_SLOPE * out)


def _check(x, weight, bias, gamma, beta):
    out = d1d_forward(x, weight, bias, gamma, beta)
    jax.block_until_ready(out)
    assert out.shape == (x.shape[0], weight.shape[0])

    # Tight check: reference fed the same bf16-rounded matmul inputs.
    x_r = x.astype(jnp.bfloat16).astype(jnp.float32)
    w_r = weight.astype(jnp.bfloat16).astype(jnp.float32)
    ref_bf16 = _reference(x_r, w_r, bias, gamma, beta)
    assert jnp.allclose(out, ref_bf16, atol=2e-3, rtol=2e-3), "bf16-matched mismatch"

    # Sanity check vs the pure-f32 module reference (bf16 MXU input rounding).
    ref_f32 = _reference(x, weight, bias, gamma, beta)
    assert jnp.allclose(out, ref_f32, atol=6e-2, rtol=6e-2), "f32-reference mismatch"


if __name__ == "__main__":
    key = jax.random.PRNGKey(0)

    # Case 1: small, lane-padded single F tile (N=8, Din=32, F=16).
    N, D_IN, FILTERS = 8, 32, 16
    kx, kw, kb = jax.random.split(key, 3)
    x = jax.random.normal(kx, (N, D_IN), dtype=jnp.float32)
    bound = 1.0 / (D_IN ** 0.5)
    weight = jax.random.uniform(kw, (FILTERS, D_IN), jnp.float32, -bound, bound)
    bias = jax.random.uniform(kb, (FILTERS,), jnp.float32, -bound, bound)
    gamma = jnp.ones((FILTERS,), jnp.float32)
    beta = jnp.zeros((FILTERS,), jnp.float32)
    _check(x, weight, bias, gamma, beta)

    # Case 2: non-lane-aligned F with a multi-tile F grid (exercises the
    # tail-tile fix and the padding slice): N=16, Din=64, F=200.
    N2, D2, F2 = 16, 64, 200
    k1, k2, k3, k4, k5 = jax.random.split(jax.random.PRNGKey(1), 5)
    x2 = jax.random.normal(k1, (N2, D2), dtype=jnp.float32)
    b2 = 1.0 / (D2 ** 0.5)
    w2 = jax.random.uniform(k2, (F2, D2), jnp.float32, -b2, b2)
    bias2 = jax.random.uniform(k3, (F2,), jnp.float32, -b2, b2)
    gamma2 = jax.random.uniform(k4, (F2,), jnp.float32, 0.5, 1.5)
    beta2 = 0.1 * jax.random.normal(k5, (F2,), dtype=jnp.float32)
    _check(x2, w2, bias2, gamma2, beta2)

    print("KERNEL_OK")
</pallas_src>

<mosaic_0001>
module attributes {stable_mosaic.version = 11 : i64} {
  func.func @_d1d_kernel(%arg0: i32, %arg1: i32, %arg2: memref<8x32xbf16, #tpu.memory_space<vmem>>, %arg3: memref<32x128xbf16, #tpu.memory_space<vmem>>, %arg4: memref<2x128xf32, #tpu.memory_space<vmem>>, %arg5: memref<8x128xf32, #tpu.memory_space<vmem>>) attributes {dimension_semantics = [#tpu.dimension_semantics<parallel>, #tpu.dimension_semantics<arbitrary>], iteration_bounds = array<i64: 1, 1>, scalar_prefetch = 0 : i64, scratch_operands = 0 : i64, tpu.core_type = #tpu.core_type<tc>, window_params = [{transform_indices = @transform_0, window_bounds = array<i64: 8, 32>}, {transform_indices = @transform_1, window_bounds = array<i64: 32, 128>}, {transform_indices = @transform_2, window_bounds = array<i64: 2, 128>}, {transform_indices = @transform_3, window_bounds = array<i64: 8, 128>}]} {
    %c0 = arith.constant 0 : index
    %c0_0 = arith.constant 0 : index
    %0 = vector.load %arg2[%c0, %c0_0] : memref<8x32xbf16, #tpu.memory_space<vmem>>, vector<8x32xbf16>
    %c0_1 = arith.constant 0 : index
    %c0_2 = arith.constant 0 : index
    %1 = vector.load %arg3[%c0_1, %c0_2] : memref<32x128xbf16, #tpu.memory_space<vmem>>, vector<32x128xbf16>
    %cst = arith.constant dense<0.000000e+00> : vector<8x128xf32>
    %2 = tpu.matmul %0, %1, %cst {dimension_numbers = #tpu.dot_dimension_numbers<[1], [0], [0], [1], [0, 0, 1, 1], [], []>} : vector<8x32xbf16>, vector<32x128xbf16>, vector<8x128xf32> -> vector<8x128xf32>
    %c0_i32 = arith.constant 0 : i32
    %3 = arith.cmpi eq, %arg1, %c0_i32 : i32
    %4 = arith.extui %3 : i1 to i32
    %c0_i32_3 = arith.constant 0 : i32
    %5 = arith.cmpi ne, %4, %c0_i32_3 : i32
    scf.if %5 {
      %c0_8 = arith.constant 0 : index
      %c0_9 = arith.constant 0 : index
      %12 = vector.load %arg5[%c0_8, %c0_9] : memref<8x128xf32, #tpu.memory_space<vmem>>, vector<8x128xf32>
      tpu.vector_store %arg5[%c0_8, %c0_9], %2 {strides = array<i32>} : memref<8x128xf32, #tpu.memory_space<vmem>>, vector<8x128xf32>,
    } else {
    }
    %c0_i32_4 = arith.constant 0 : i32
    %6 = arith.cmpi sgt, %arg1, %c0_i32_4 : i32
    %7 = arith.extui %6 : i1 to i32
    %c0_i32_5 = arith.constant 0 : i32
    %8 = arith.cmpi ne, %7, %c0_i32_5 : i32
    scf.if %8 {
      %c0_8 = arith.constant 0 : index
      %c0_9 = arith.constant 0 : index
      %12 = vector.load %arg5[%c0_8, %c0_9] : memref<8x128xf32, #tpu.memory_space<vmem>>, vector<8x128xf32>
      %13 = arith.addf %12, %2 : vector<8x128xf32>
      %c0_10 = arith.constant 0 : index
      %c0_11 = arith.constant 0 : index
      %14 = vector.load %arg5[%c0_10, %c0_11] : memref<8x128xf32, #tpu.memory_space<vmem>>, vector<8x128xf32>
      tpu.vector_store %arg5[%c0_10, %c0_11], %13 {strides = array<i32>} : memref<8x128xf32, #tpu.memory_space<vmem>>, vector<8x128xf32>,
    } else {
    }
    %c0_i32_6 = arith.constant 0 : i32
    %9 = arith.cmpi eq, %arg1, %c0_i32_6 : i32
    %10 = arith.extui %9 : i1 to i32
    %c0_i32_7 = arith.constant 0 : i32
    %11 = arith.cmpi ne, %10, %c0_i32_7 : i32
    scf.if %11 {
      %c0_8 = arith.constant 0 : index
      %c0_9 = arith.constant 0 : index
      %12 = vector.load %arg5[%c0_8, %c0_9] : memref<8x128xf32, #tpu.memory_space<vmem>>, vector<8x128xf32>
      %cst_10 = arith.constant dense<0.000000e+00> : vector<128xf32>
      %13 = vector.multi_reduction <add>, %12, %cst_10 [0] : vector<8x128xf32> to vector<128xf32>
      %14 = vector.shape_cast %13 : vector<128xf32> to vector<1x128xf32>
      %cst_11 = arith.constant 1.250000e-01 : f32
      %15 = vector.broadcast %cst_11 : f32 to vector<1x128xf32>
      %16 = arith.mulf %14, %15 : vector<1x128xf32>
      %17 = arith.mulf %12, %12 : vector<8x128xf32>
      %cst_12 = arith.constant dense<0.000000e+00> : vector<128xf32>
      %18 = vector.multi_reduction <add>, %17, %cst_12 [0] : vector<8x128xf32> to vector<128xf32>
      %19 = vector.shape_cast %18 : vector<128xf32> to vector<1x128xf32>
      %cst_13 = arith.constant 1.250000e-01 : f32
      %20 = vector.broadcast %cst_13 : f32 to vector<1x128xf32>
      %21 = arith.mulf %19, %20 : vector<1x128xf32>
      %22 = arith.mulf %16, %16 : vector<1x128xf32>
      %23 = arith.subf %21, %22 : vector<1x128xf32>
      %cst_14 = arith.constant 0.000000e+00 : f32
      %24 = vector.broadcast %cst_14 : f32 to vector<1x128xf32>
      %25 = arith.maximumf %23, %24 : vector<1x128xf32>
      %cst_15 = arith.constant 9.99999974E-6 : f32
      %26 = vector.broadcast %cst_15 : f32 to vector<1x128xf32>
      %27 = arith.addf %25, %26 : vector<1x128xf32>
      %28 = math.rsqrt %27 : vector<1x128xf32>
      %c0_16 = arith.constant 0 : index
      %c0_17 = arith.constant 0 : index
      %29 = vector.load %arg4[%c0_16, %c0_17] : memref<2x128xf32, #tpu.memory_space<vmem>>, vector<2x128xf32>
      %30 = vector.extract_strided_slice %29 {offsets = [0, 0], sizes = [1, 128], strides = [1, 1]} : vector<2x128xf32> to vector<1x128xf32>
      %31 = arith.mulf %30, %28 : vector<1x128xf32>
      %32 = vector.extract_strided_slice %29 {offsets = [1, 0], sizes = [1, 128], strides = [1, 1]} : vector<2x128xf32> to vector<1x128xf32>
      %33 = arith.mulf %16, %31 : vector<1x128xf32>
      %34 = arith.subf %32, %33 : vector<1x128xf32>
      %35 = vector.broadcast %31 : vector<1x128xf32> to vector<8x128xf32>
      %36 = arith.mulf %12, %35 : vector<8x128xf32>
      %37 = vector.broadcast %34 : vector<1x128xf32> to vector<8x128xf32>
      %38 = arith.addf %36, %37 : vector<8x128xf32>
      %cst_18 = arith.constant 2.000000e-01 : f32
      %39 = vector.broadcast %cst_18 : f32 to vector<8x128xf32>
      %40 = arith.mulf %39, %38 : vector<8x128xf32>
      %41 = arith.maximumf %38, %40 : vector<8x128xf32>
      %c0_19 = arith.constant 0 : index
      %c0_20 = arith.constant 0 : index
      %42 = vector.load %arg5[%c0_19, %c0_20] : memref<8x128xf32, #tpu.memory_space<vmem>>, vector<8x128xf32>
      tpu.vector_store %arg5[%c0_19, %c0_20], %41 {strides = array<i32>} : memref<8x128xf32, #tpu.memory_space<vmem>>, vector<8x128xf32>,
    } else {
    }
    return
  }
  func.func @transform_0(%arg0: i32, %arg1: i32) -> (i32, i32) {
    %c0_i32 = arith.constant 0 : i32
    %c0_i32_0 = arith.constant 0 : i32
    return %c0_i32, %arg1 : i32, i32
  }
  func.func @transform_1(%arg0: i32, %arg1: i32) -> (i32, i32) {
    %c0_i32 = arith.constant 0 : i32
    return %arg1, %arg0 : i32, i32
  }
  func.func @transform_2(%arg0: i32, %arg1: i32) -> (i32, i32) {
    %c0_i32 = arith.constant 0 : i32
    %c0_i32_0 = arith.constant 0 : i32
    return %c0_i32, %arg0 : i32, i32
  }
  func.func @transform_3(%arg0: i32, %arg1: i32) -> (i32, i32) {
    %c0_i32 = arith.constant 0 : i32
    %c0_i32_0 = arith.constant 0 : i32
    return %c0_i32, %arg0 : i32, i32
  }
}

</mosaic_0001>

<llo_original>
// kernel: tpu_custom_call.1
$region0: #{tpu_custom_call.1}
  #allocation0 [shape = 'u32[]', space=smem, size = 0x4, offset = 0x4, fixed_abs, tag = 'smem constant byte address 0x4 - core index']
  #allocation1 [shape = 'u32[72,128]{1,0:T(1,128)}', space=vmem, size = 0x9000, scoped, tag = 'internal scratch']
  %s0 = inlined_call_operand.hbm [shape: bf16[8,32], index: 0, kind: input, shape index: {}]
  %s1 = inlined_call_operand.hbm [shape: bf16[32,128], index: 1, kind: input, shape index: {}]
  %s2 = inlined_call_operand.hbm [shape: f32[2,128], index: 2, kind: input, shape index: {}]
  %s3 = inlined_call_operand.hbm [shape: f32[8,128], index: 3, kind: output, shape index: {}]
  %s4 = sld [smem:[#allocation0]]
  $region46: #{tpu_custom_call.1} parent=0
    _
  %s6 = ssub.s32 1, %s4
  %s7 = scalar_select 0, %s6, %s4
  $region1: #{tpu_custom_call.1} parent=0
    #allocation2 [shape = 'u8[2048]{0}', space=vmem, size = 0x800, scoped, tag = 'input window, operand 0, single buffered']
    #allocation3 [shape = 's32[1]{0}', space=sflag, size = 0x4, scoped, tag = 'scoped memory for tpu_custom_call.1']
    #allocation4 [shape = 's32[1]{0}', space=sflag, size = 0x4, scoped, tag = 'scoped memory for tpu_custom_call.1']
    #allocation5 [shape = 'u8[8192]{0}', space=vmem, size = 0x2000, scoped, tag = 'input window, operand 1, single buffered']
    #allocation6 [shape = 's32[1]{0}', space=sflag, size = 0x4, scoped, tag = 'scoped memory for tpu_custom_call.1']
    #allocation7 [shape = 'u8[1024]{0}', space=vmem, size = 0x400, scoped, tag = 'input window, operand 2, single buffered']
    #allocation8 [shape = 'u8[4096]{0}', space=vmem, size = 0x1000, scoped, tag = 'output window, operand 0, single buffered']
    %8 = vsyncpa [#allocation3], 0
    %9 = vsyncpa [#allocation6], 0
    %10 = vsyncpa [#allocation4], 0
    // Predicated region
    $region2: #{tpu_custom_call.1} parent=1 // pred_check
      _
    $region3: #{tpu_custom_call.1} parent=1 // pred_check_branch
      %12 = sbr.rel (0) target = $region5
    $region4: #{tpu_custom_call.1} parent=1 // pred_region
      %14 = vsyncadd [#allocation3], 0
      %s16 = sshll.u32 %s0, 4
      %s17 = int_to_ptr.hbm [resolvable:$true] %s16
      %s18 = sshll.u32 [#allocation2], 4
      %s19 = int_to_ptr.vmem [resolvable:$true] %s18
      %21 = dma.hbm_to_vmem [thread:$0]  %s17, 64, %s19, [#allocation3]
    $region5: #{tpu_custom_call.1} parent=1 // pred_fallthru
      _
    // Predicated region
    $region6: #{tpu_custom_call.1} parent=1 // pred_check
      _
    $region7: #{tpu_custom_call.1} parent=1 // pred_check_branch
      %23 = sbr.rel (0) target = $region9
    $region8: #{tpu_custom_call.1} parent=1 // pred_region
      %25 = vsyncadd [#allocation6], 0
      %s26 = sshll.u32 %s1, 4
      %s27 = int_to_ptr.hbm [resolvable:$true] %s26
      %s28 = sshll.u32 [#allocation5], 4
      %s29 = int_to_ptr.vmem [resolvable:$true] %s28
      %34 = dma.hbm_to_vmem [thread:$0]  %s27, 256, %s29, [#allocation6], 64, 64, 4
    $region9: #{tpu_custom_call.1} parent=1 // pred_fallthru
      _
    // Predicated region
    $region10: #{tpu_custom_call.1} parent=1 // pred_check
      _
    $region11: #{tpu_custom_call.1} parent=1 // pred_check_branch
      %36 = sbr.rel (0) target = $region13
    $region12: #{tpu_custom_call.1} parent=1 // pred_region
      %38 = vsyncadd [#allocation6], 0
      %s40 = sshll.u32 %s2, 4
      %s41 = int_to_ptr.hbm [resolvable:$true] %s40
      %s42 = sshll.u32 [#allocation7], 4
      %s43 = int_to_ptr.vmem [resolvable:$true] %s42
      %45 = dma.hbm_to_vmem [thread:$0]  %s41, 32, %s43, [#allocation6]
    $region13: #{tpu_custom_call.1} parent=1 // pred_fallthru
      _
    // Predicated region
    $region14: #{tpu_custom_call.1} parent=1 // pred_check
      _
    $region15: #{tpu_custom_call.1} parent=1 // pred_check_branch
      %47 = sbr.rel (0) target = $region17
    $region16: #{tpu_custom_call.1} parent=1 // pred_region
      %49 = dma.done [#allocation3], 64
    $region17: #{tpu_custom_call.1} parent=1 // pred_fallthru
      _
    // Predicated region
    $region18: #{tpu_custom_call.1} parent=1 // pred_check
      _
    $region19: #{tpu_custom_call.1} parent=1 // pred_check_branch
      %51 = sbr.rel (0) target = $region21
    $region20: #{tpu_custom_call.1} parent=1 // pred_region
      %53 = dma.done [#allocation6], 256
    $region21: #{tpu_custom_call.1} parent=1 // pred_fallthru
      _
    // Predicated region
    $region22: #{tpu_custom_call.1} parent=1 // pred_check
      _
    $region23: #{tpu_custom_call.1} parent=1 // pred_check_branch
      %55 = sbr.rel (0) target = $region25
    $region24: #{tpu_custom_call.1} parent=1 // pred_region
      %57 = dma.done [#allocation6], 32
    $region25: #{tpu_custom_call.1} parent=1 // pred_fallthru
      _
    %v59 = vld [vmem:[#allocation2] sm:$0xf]
    %v60 = vld [vmem:[#allocation5] sm:$0xf]
    %v61 = vld [vmem:[#allocation5 + $0x4] sm:$0xf]
    %v62 = vld [vmem:[#allocation5 + $0x8] sm:$0xf]
    %v63 = vld [vmem:[#allocation5 + $0xc] sm:$0xf]
    %v68 = vunpack.c.l.b16 %v60
    %v69 = vunpack.c.l.b16 %v61
    %v70 = vunpack.c.l.b16 %v62
    %v71 = vunpack.c.l.b16 %v63
    %v72 = vpack.c.b16 %v69, %v68
    %v73 = vpack.c.b16 %v71, %v70
    %vm76 = vcmask 261120
    %v78 = vsel %vm76, %v59, 0
    %80 = vmatpush.bf16.msra.mxu0 0
    %81 = vmatpush.bf16.msra.mxu0 0
    %82 = vmatpush.bf16.msra.mxu0 0
    %83 = vmatpush.bf16.msra.mxu0 0
    %84 = vmatpush.bf16.msra.mxu0 0
    %85 = vmatpush.bf16.msra.mxu0 0
    %86 = vmatpush.bf16.msra.mxu0 %v73
    %87 = vmatpush.bf16.msra.mxu0 %v72
    %88 = vmatmul.bf16.gmra.mxu0 %v78
    %v89 = vpop.f32.mrf.mxu0
    %v90 = vadd.f32 0.0, %v89
    %v91 = vpop.f32.mrf.mxu0
    %92 = vdwg.mxu0
    %p93 = scmp.eq.s32.totalorder 0, 0
    // Predicated region
    $region26: #{tpu_custom_call.1} parent=1 // pred_check
      %p94 = pneg %p93
    $region27: #{tpu_custom_call.1} parent=1 // pred_check_branch
      %96 = sbr.rel (%p94) target = $region29
    $region28: #{tpu_custom_call.1} parent=1 // pred_region
      %97 = vst [vmem:[#allocation8] sm:$0xff] %v90
    $region29: #{tpu_custom_call.1} parent=1 // pred_fallthru
      _
    %p98 = scmp.gt.s32.totalorder 0, 0
    // Predicated region
    $region30: #{tpu_custom_call.1} parent=1 // pred_check
      %p99 = pneg %p98
    $region31: #{tpu_custom_call.1} parent=1 // pred_check_branch
      %101 = sbr.rel (%p99) target = $region33
    $region32: #{tpu_custom_call.1} parent=1 // pred_region
      %v102 = vld [vmem:[#allocation8] sm:$0xff]
      %v103 = vadd.f32 %v102, %v90
      %104 = vst [vmem:[#allocation8] sm:$0xff] %v103
    $region33: #{tpu_custom_call.1} parent=1 // pred_fallthru
      _
    // Predicated region
    $region34: #{tpu_custom_call.1} parent=1 // pred_check
      %p105 = pneg %p93
    $region35: #{tpu_custom_call.1} parent=1 // pred_check_branch
      %107 = sbr.rel (%p105) target = $region37
    $region36: #{tpu_custom_call.1} parent=1 // pred_region
      %v108 = vld [vmem:[#allocation8] sm:$0xff]
      %v109 = vrot.slane %v108, 4
      %v110 = vadd.f32 %v108, %v109
      %v111 = vrot.slane %v110, 2
      %v112 = vadd.f32 %v110, %v111
      %v113 = vrot.slane %v112, 1
      %v114 = vadd.f32 %v112, %v113
      %v115 = vmul.f32 %v114, 0.125
      %v116 = vmul.f32 %v108, %v108
      %v117 = vrot.slane %v116, 4
      %v118 = vadd.f32 %v116, %v117
      %v119 = vrot.slane %v118, 2
      %v120 = vadd.f32 %v118, %v119
      %v121 = vrot.slane %v120, 1
      %v122 = vadd.f32 %v120, %v121
      %v123 = vmul.f32 %v122, 0.125
      %v124 = vmul.f32 %v115, %v115
      %v125 = vsub.f32 %v123, %v124
      %v126 = vmax.f32 %v125, 0.0
      %v127 = vadd.f32 %v126, 1e-05
      %v128 = vrsqrt.pop %v127
      %v129 = vmul.f32 %v128, %v127
      %v130 = vmul.f32 %v129, %v128
      %v131 = vmul.f32 0.5, %v130
      %v132 = vsub.f32 1.5, %v131
      %v133 = vmul.f32 %v128, %v132
      %vm134 = vweird.f32 %v127
      %vm135 = vweird.f32 %v128
      %vm136 = vmor %vm134, %vm135
      %v137 = vsel %vm136, %v128, %v133
      %v138 = vld [vmem:[#allocation7] sm:$0x3]
      %v139 = vmul.f32 %v138, %v137
      %v140 = vmul.f32 %v115, %v139
      %v142 = vrot.slane %v140, 7
      %v144 = vsub.f32 %v138, %v142
      %v145 = vperm.slane %v139, 0
      %v146 = vmul.f32 %v108, %v145
      %v147 = vperm.slane %v144, 1
      %v148 = vadd.f32 %v146, %v147
      %v149 = vmul.f32 %v148, 0.2
      %v150 = vmax.f32 %v148, %v149
      %151 = vst [vmem:[#allocation8] sm:$0xff] %v150
    $region37: #{tpu_custom_call.1} parent=1 // pred_fallthru
      _
    // Predicated region
    $region38: #{tpu_custom_call.1} parent=1 // pred_check
      _
    $region39: #{tpu_custom_call.1} parent=1 // pred_check_branch
      %153 = sbr.rel (0) target = $region41
    $region40: #{tpu_custom_call.1} parent=1 // pred_region
      %155 = vsyncadd [#allocation4], 0
      %s157 = sshll.u32 [#allocation8], 4
      %s158 = int_to_ptr.vmem [resolvable:$true] %s157
      %s159 = sshll.u32 %s3, 4
      %s160 = int_to_ptr.hbm [resolvable:$true] %s159
      %162 = dma.vmem_to_hbm [thread:$0]  %s158, 128, %s160, [#allocation4]
    $region41: #{tpu_custom_call.1} parent=1 // pred_fallthru
      _
    // Predicated region
    $region42: #{tpu_custom_call.1} parent=1 // pred_check
      _
    $region43: #{tpu_custom_call.1} parent=1 // pred_check_branch
      %164 = sbr.rel (0) target = $region45
    $region44: #{tpu_custom_call.1} parent=1 // pred_region
      %166 = dma.done [#allocation4], 128
    $region45: #{tpu_custom_call.1} parent=1 // pred_fallthru
      _
    %167 = vsyncpa [#allocation3], 1
    %168 = vsyncpa [#allocation6], 1
    %169 = vsyncpa [#allocation4], 1

</llo_original>
